<compile_context>
chip_gen: v7x
topology: tpu7x:2x2x1
jax: 0.10.0
libtpu: 0.0.40
codegen_flags: <defaults>
</compile_context>

<pallas_src>
import functools

import jax
import jax.numpy as jnp
from jax.experimental import pallas as pl
from jax.experimental.pallas import tpu as pltpu


def _round_up(x, m):
    return ((x + m - 1) // m) * m


def _critic_kernel(states_ref,
                   w1_ref, b1_ref, g_ref, beta_ref,
                   w2_ref, b2_ref,
                   w3_ref, b3_ref,
                   w4_ref, b4_ref,
                   wo_ref, bo_ref,
                   out_ref,
                   *, inv_hidden):
    mm_dtype = w1_ref.dtype
    x = states_ref[...]

    # --- feature_extractor: Linear -> ReLU -> LayerNorm ---
    h = jnp.dot(x.astype(mm_dtype), w1_ref[...],
                preferred_element_type=jnp.float32) + b1_ref[...]
    h = jnp.maximum(h, 0.0)

    # Fused one-pass LayerNorm statistics.  Padded lanes of h are exactly 0,
    # so summing over the padded width and dividing by the true hidden_dim
    # (inv_hidden) is exact.
    s = jnp.sum(h, axis=-1, keepdims=True)
    s2 = jnp.sum(h * h, axis=-1, keepdims=True)
    mean = s * inv_hidden
    var = jnp.maximum(s2 * inv_hidden - mean * mean, 0.0)
    h = (h - mean) * jax.lax.rsqrt(var + 1e-5)
    # gamma is zero on padded lanes -> padded lanes return to exactly 0.
    h = h * g_ref[...] + beta_ref[...]

    # --- three residual critic layers: h = h + Dropout(ReLU(Linear(h))) ---
    for w_ref, b_ref in ((w2_ref, b2_ref), (w3_ref, b3_ref), (w4_ref, b4_ref)):
        y = jnp.dot(h.astype(mm_dtype), w_ref[...],
                    preferred_element_type=jnp.float32) + b_ref[...]
        h = h + jnp.maximum(y, 0.0)

    # --- output layer (lane-dense 128-wide store; extra lanes are zero) ---
    out_ref[...] = (jnp.dot(h.astype(mm_dtype), wo_ref[...],
                            preferred_element_type=jnp.float32)
                    + bo_ref[...]).astype(out_ref.dtype)


def centralized_critic_forward(states, params, *, block_batch=512,
                               matmul_dtype=jnp.bfloat16):
    """states: (B, state_dim) float32. params: dict of weights (see init_params)."""
    B, state_dim = states.shape
    hidden_dim = params["w1"].shape[1]
    num_agents = params["wo"].shape[1]

    # Padded (lane-aligned) dims.
    Sp = _round_up(state_dim, 128)
    Hp = _round_up(hidden_dim, 128)
    Op = _round_up(num_agents, 128)

    # Batch tile: multiple of 8 sublanes; pad B up to a whole number of tiles.
    TB = min(block_batch, _round_up(B, 8))
    Bp = _round_up(B, TB)
    num_tiles = Bp // TB

    def pad2(a, rows, cols):
        return jnp.pad(a, ((0, rows - a.shape[0]), (0, cols - a.shape[1])))

    states_p = pad2(states.astype(jnp.float32), Bp, Sp)

    # Weights stored transposed vs PyTorch: (in, out) so the kernel does x @ W.
    # Matmul operands cast once to bf16 (f32 accumulate in the kernel);
    # biases / LN affine stay f32.
    w1 = pad2(params["w1"], Sp, Hp).astype(matmul_dtype)
    w2 = pad2(params["w2"], Hp, Hp).astype(matmul_dtype)
    w3 = pad2(params["w3"], Hp, Hp).astype(matmul_dtype)
    w4 = pad2(params["w4"], Hp, Hp).astype(matmul_dtype)
    wo = pad2(params["wo"], Hp, Op).astype(matmul_dtype)
    b1 = pad2(params["b1"], 1, Hp)
    b2 = pad2(params["b2"], 1, Hp)
    b3 = pad2(params["b3"], 1, Hp)
    b4 = pad2(params["b4"], 1, Hp)
    bo = pad2(params["bo"], 1, Op)
    ln_g = pad2(params["ln_g"], 1, Hp)   # zero-padded gamma kills padded lanes
    ln_b = pad2(params["ln_b"], 1, Hp)

    weight_args = (w1, b1, ln_g, ln_b, w2, b2, w3, b3, w4, b4, wo, bo)

    # Right-size the VMEM request: resident weights (x2 for Pallas buffering)
    # plus double-buffered states/out tiles, with generous slack; clamp to
    # [16 MiB, 48 MiB] so it stays safe on v7x (64 MiB physical per TC).
    weight_bytes = sum(int(a.size) * a.dtype.itemsize for a in weight_args)
    tile_bytes = (TB * Sp + TB * Op) * 4
    working_set = 2 * weight_bytes + 2 * tile_bytes
    vmem_limit = int(min(48 << 20, max(16 << 20, 4 * working_set)))

    states_spec = pl.BlockSpec((TB, Sp), lambda i: (i, 0))
    resident = lambda a: pl.BlockSpec(a.shape, lambda i: (0, 0))

    out_p = pl.pallas_call(
        functools.partial(_critic_kernel, inv_hidden=1.0 / float(hidden_dim)),
        out_shape=jax.ShapeDtypeStruct((Bp, Op), jnp.float32),
        grid=(num_tiles,),
        in_specs=[states_spec] + [resident(a) for a in weight_args],
        out_specs=pl.BlockSpec((TB, Op), lambda i: (i, 0)),
        compiler_params=pltpu.CompilerParams(
            dimension_semantics=("parallel",),
            vmem_limit_bytes=vmem_limit,
        ),
    )(states_p, *weight_args)

    return out_p[:B, :num_agents]


def init_params(key, state_dim, hidden_dim, num_agents):
    """Deterministic xavier_uniform weights (biases zero), matching module __init__."""
    def xavier(k, fan_in, fan_out):
        bound = jnp.sqrt(6.0 / (fan_in + fan_out))
        # stored as (in, out) == transpose of PyTorch's (out, in); distribution identical.
        return jax.random.uniform(k, (fan_in, fan_out), jnp.float32, -bound, bound)

    ks = jax.random.split(key, 5)
    return {
        "w1": xavier(ks[0], state_dim, hidden_dim),
        "b1": jnp.zeros((1, hidden_dim), jnp.float32),
        "ln_g": jnp.ones((1, hidden_dim), jnp.float32),
        "ln_b": jnp.zeros((1, hidden_dim), jnp.float32),
        "w2": xavier(ks[1], hidden_dim, hidden_dim),
        "b2": jnp.zeros((1, hidden_dim), jnp.float32),
        "w3": xavier(ks[2], hidden_dim, hidden_dim),
        "b3": jnp.zeros((1, hidden_dim), jnp.float32),
        "w4": xavier(ks[3], hidden_dim, hidden_dim),
        "b4": jnp.zeros((1, hidden_dim), jnp.float32),
        "wo": xavier(ks[4], hidden_dim, num_agents),
        "bo": jnp.zeros((1, num_agents), jnp.float32),
    }


def _reference_forward(states, p, matmul_dtype=jnp.bfloat16):
    """Pure-JAX reference mirroring the kernel's matmul precision."""
    def mm(x, w):
        return jnp.dot(x.astype(matmul_dtype), w.astype(matmul_dtype),
                       preferred_element_type=jnp.float32)

    h = jnp.maximum(mm(states, p["w1"]) + p["b1"], 0.0)
    mean = jnp.mean(h, axis=-1, keepdims=True)
    var = jnp.mean((h - mean) ** 2, axis=-1, keepdims=True)
    h = (h - mean) / jnp.sqrt(var + 1e-5) * p["ln_g"] + p["ln_b"]
    for w, b in (("w2", "b2"), ("w3", "b3"), ("w4", "b4")):
        h = h + jnp.maximum(mm(h, p[w]) + p[b], 0.0)
    return mm(h, p["wo"]) + p["bo"]


if __name__ == "__main__":
    batch = 8
    state_dim = 16
    hidden_dim = 32
    num_agents = 4

    key = jax.random.PRNGKey(0)
    k_x, k_p = jax.random.split(key)
    states = jax.random.normal(k_x, (batch, state_dim), jnp.float32)
    params = init_params(k_p, state_dim, hidden_dim, num_agents)

    out = centralized_critic_forward(states, params)
    out = jax.block_until_ready(out)

    ref = _reference_forward(states, params)
    assert out.shape == (batch, num_agents)
    assert jnp.allclose(out, ref, atol=1e-3, rtol=1e-3), "mismatch vs reference"

    print("KERNEL_OK")
</pallas_src>

<mosaic_0001>
module attributes {stable_mosaic.version = 11 : i64} {
  func.func @_critic_kernel(%arg0: i32, %arg1: memref<8x128xf32, #tpu.memory_space<vmem>>, %arg2: memref<128x128xbf16, #tpu.memory_space<vmem>>, %arg3: memref<1x128xf32, #tpu.memory_space<vmem>>, %arg4: memref<1x128xf32, #tpu.memory_space<vmem>>, %arg5: memref<1x128xf32, #tpu.memory_space<vmem>>, %arg6: memref<128x128xbf16, #tpu.memory_space<vmem>>, %arg7: memref<1x128xf32, #tpu.memory_space<vmem>>, %arg8: memref<128x128xbf16, #tpu.memory_space<vmem>>, %arg9: memref<1x128xf32, #tpu.memory_space<vmem>>, %arg10: memref<128x128xbf16, #tpu.memory_space<vmem>>, %arg11: memref<1x128xf32, #tpu.memory_space<vmem>>, %arg12: memref<128x128xbf16, #tpu.memory_space<vmem>>, %arg13: memref<1x128xf32, #tpu.memory_space<vmem>>, %arg14: memref<8x128xf32, #tpu.memory_space<vmem>>) attributes {dimension_semantics = [#tpu.dimension_semantics<parallel>], iteration_bounds = array<i64: 1>, scalar_prefetch = 0 : i64, scratch_operands = 0 : i64, tpu.core_type = #tpu.core_type<tc>, window_params = [{transform_indices = @transform_0, window_bounds = array<i64: 8, 128>}, {pipeline_mode = #tpu.pipeline_mode<synchronous>, transform_indices = @transform_1, window_bounds = array<i64: 128, 128>}, {pipeline_mode = #tpu.pipeline_mode<synchronous>, transform_indices = @transform_2, window_bounds = array<i64: 1, 128>}, {pipeline_mode = #tpu.pipeline_mode<synchronous>, transform_indices = @transform_3, window_bounds = array<i64: 1, 128>}, {pipeline_mode = #tpu.pipeline_mode<synchronous>, transform_indices = @transform_4, window_bounds = array<i64: 1, 128>}, {pipeline_mode = #tpu.pipeline_mode<synchronous>, transform_indices = @transform_5, window_bounds = array<i64: 128, 128>}, {pipeline_mode = #tpu.pipeline_mode<synchronous>, transform_indices = @transform_6, window_bounds = array<i64: 1, 128>}, {pipeline_mode = #tpu.pipeline_mode<synchronous>, transform_indices = @transform_7, window_bounds = array<i64: 128, 128>}, {pipeline_mode = #tpu.pipeline_mode<synchronous>, transform_indices = @transform_8, window_bounds = array<i64: 1, 128>}, {pipeline_mode = #tpu.pipeline_mode<synchronous>, transform_indices = @transform_9, window_bounds = array<i64: 128, 128>}, {pipeline_mode = #tpu.pipeline_mode<synchronous>, transform_indices = @transform_10, window_bounds = array<i64: 1, 128>}, {pipeline_mode = #tpu.pipeline_mode<synchronous>, transform_indices = @transform_11, window_bounds = array<i64: 128, 128>}, {pipeline_mode = #tpu.pipeline_mode<synchronous>, transform_indices = @transform_12, window_bounds = array<i64: 1, 128>}, {transform_indices = @transform_13, window_bounds = array<i64: 8, 128>}]} {
    %c0 = arith.constant 0 : index
    %c0_0 = arith.constant 0 : index
    %0 = vector.load %arg1[%c0, %c0_0] : memref<8x128xf32, #tpu.memory_space<vmem>>, vector<8x128xf32>
    %1 = arith.truncf %0 : vector<8x128xf32> to vector<8x128xbf16>
    %c0_1 = arith.constant 0 : index
    %c0_2 = arith.constant 0 : index
    %2 = vector.load %arg2[%c0_1, %c0_2] : memref<128x128xbf16, #tpu.memory_space<vmem>>, vector<128x128xbf16>
    %cst = arith.constant dense<0.000000e+00> : vector<8x128xf32>
    %3 = tpu.matmul %1, %2, %cst {dimension_numbers = #tpu.dot_dimension_numbers<[1], [0], [0], [1], [0, 0, 1, 1], [], []>} : vector<8x128xbf16>, vector<128x128xbf16>, vector<8x128xf32> -> vector<8x128xf32>
    %c0_3 = arith.constant 0 : index
    %c0_4 = arith.constant 0 : index
    %4 = vector.load %arg3[%c0_3, %c0_4] : memref<1x128xf32, #tpu.memory_space<vmem>>, vector<1x128xf32>
    %5 = vector.broadcast %4 : vector<1x128xf32> to vector<8x128xf32>
    %6 = arith.addf %3, %5 : vector<8x128xf32>
    %cst_5 = arith.constant 0.000000e+00 : f32
    %7 = vector.broadcast %cst_5 : f32 to vector<8x128xf32>
    %8 = arith.maximumf %6, %7 : vector<8x128xf32>
    %cst_6 = arith.constant dense<0.000000e+00> : vector<8xf32>
    %9 = vector.multi_reduction <add>, %8, %cst_6 [1] : vector<8x128xf32> to vector<8xf32>
    %10 = vector.shape_cast %9 : vector<8xf32> to vector<8x1xf32>
    %11 = arith.mulf %8, %8 : vector<8x128xf32>
    %cst_7 = arith.constant dense<0.000000e+00> : vector<8xf32>
    %12 = vector.multi_reduction <add>, %11, %cst_7 [1] : vector<8x128xf32> to vector<8xf32>
    %13 = vector.shape_cast %12 : vector<8xf32> to vector<8x1xf32>
    %cst_8 = arith.constant 3.125000e-02 : f32
    %14 = vector.broadcast %cst_8 : f32 to vector<8x1xf32>
    %15 = arith.mulf %10, %14 : vector<8x1xf32>
    %cst_9 = arith.constant 3.125000e-02 : f32
    %16 = vector.broadcast %cst_9 : f32 to vector<8x1xf32>
    %17 = arith.mulf %13, %16 : vector<8x1xf32>
    %18 = arith.mulf %15, %15 : vector<8x1xf32>
    %19 = arith.subf %17, %18 : vector<8x1xf32>
    %cst_10 = arith.constant 0.000000e+00 : f32
    %20 = vector.broadcast %cst_10 : f32 to vector<8x1xf32>
    %21 = arith.maximumf %19, %20 : vector<8x1xf32>
    %22 = vector.broadcast %15 : vector<8x1xf32> to vector<8x128xf32>
    %23 = arith.subf %8, %22 : vector<8x128xf32>
    %cst_11 = arith.constant 9.99999974E-6 : f32
    %24 = vector.broadcast %cst_11 : f32 to vector<8x1xf32>
    %25 = arith.addf %21, %24 : vector<8x1xf32>
    %26 = math.rsqrt %25 : vector<8x1xf32>
    %27 = vector.broadcast %26 : vector<8x1xf32> to vector<8x128xf32>
    %28 = arith.mulf %23, %27 : vector<8x128xf32>
    %c0_12 = arith.constant 0 : index
    %c0_13 = arith.constant 0 : index
    %29 = vector.load %arg4[%c0_12, %c0_13] : memref<1x128xf32, #tpu.memory_space<vmem>>, vector<1x128xf32>
    %30 = vector.broadcast %29 : vector<1x128xf32> to vector<8x128xf32>
    %31 = arith.mulf %28, %30 : vector<8x128xf32>
    %c0_14 = arith.constant 0 : index
    %c0_15 = arith.constant 0 : index
    %32 = vector.load %arg5[%c0_14, %c0_15] : memref<1x128xf32, #tpu.memory_space<vmem>>, vector<1x128xf32>
    %33 = vector.broadcast %32 : vector<1x128xf32> to vector<8x128xf32>
    %34 = arith.addf %31, %33 : vector<8x128xf32>
    %35 = arith.truncf %34 : vector<8x128xf32> to vector<8x128xbf16>
    %c0_16 = arith.constant 0 : index
    %c0_17 = arith.constant 0 : index
    %36 = vector.load %arg6[%c0_16, %c0_17] : memref<128x128xbf16, #tpu.memory_space<vmem>>, vector<128x128xbf16>
    %cst_18 = arith.constant dense<0.000000e+00> : vector<8x128xf32>
    %37 = tpu.matmul %35, %36, %cst_18 {dimension_numbers = #tpu.dot_dimension_numbers<[1], [0], [0], [1], [0, 0, 1, 1], [], []>} : vector<8x128xbf16>, vector<128x128xbf16>, vector<8x128xf32> -> vector<8x128xf32>
    %c0_19 = arith.constant 0 : index
    %c0_20 = arith.constant 0 : index
    %38 = vector.load %arg7[%c0_19, %c0_20] : memref<1x128xf32, #tpu.memory_space<vmem>>, vector<1x128xf32>
    %39 = vector.broadcast %38 : vector<1x128xf32> to vector<8x128xf32>
    %40 = arith.addf %37, %39 : vector<8x128xf32>
    %cst_21 = arith.constant 0.000000e+00 : f32
    %41 = vector.broadcast %cst_21 : f32 to vector<8x128xf32>
    %42 = arith.maximumf %40, %41 : vector<8x128xf32>
    %43 = arith.addf %34, %42 : vector<8x128xf32>
    %44 = arith.truncf %43 : vector<8x128xf32> to vector<8x128xbf16>
    %c0_22 = arith.constant 0 : index
    %c0_23 = arith.constant 0 : index
    %45 = vector.load %arg8[%c0_22, %c0_23] : memref<128x128xbf16, #tpu.memory_space<vmem>>, vector<128x128xbf16>
    %cst_24 = arith.constant dense<0.000000e+00> : vector<8x128xf32>
    %46 = tpu.matmul %44, %45, %cst_24 {dimension_numbers = #tpu.dot_dimension_numbers<[1], [0], [0], [1], [0, 0, 1, 1], [], []>} : vector<8x128xbf16>, vector<128x128xbf16>, vector<8x128xf32> -> vector<8x128xf32>
    %c0_25 = arith.constant 0 : index
    %c0_26 = arith.constant 0 : index
    %47 = vector.load %arg9[%c0_25, %c0_26] : memref<1x128xf32, #tpu.memory_space<vmem>>, vector<1x128xf32>
    %48 = vector.broadcast %47 : vector<1x128xf32> to vector<8x128xf32>
    %49 = arith.addf %46, %48 : vector<8x128xf32>
    %cst_27 = arith.constant 0.000000e+00 : f32
    %50 = vector.broadcast %cst_27 : f32 to vector<8x128xf32>
    %51 = arith.maximumf %49, %50 : vector<8x128xf32>
    %52 = arith.addf %43, %51 : vector<8x128xf32>
    %53 = arith.truncf %52 : vector<8x128xf32> to vector<8x128xbf16>
    %c0_28 = arith.constant 0 : index
    %c0_29 = arith.constant 0 : index
    %54 = vector.load %arg10[%c0_28, %c0_29] : memref<128x128xbf16, #tpu.memory_space<vmem>>, vector<128x128xbf16>
    %cst_30 = arith.constant dense<0.000000e+00> : vector<8x128xf32>
    %55 = tpu.matmul %53, %54, %cst_30 {dimension_numbers = #tpu.dot_dimension_numbers<[1], [0], [0], [1], [0, 0, 1, 1], [], []>} : vector<8x128xbf16>, vector<128x128xbf16>, vector<8x128xf32> -> vector<8x128xf32>
    %c0_31 = arith.constant 0 : index
    %c0_32 = arith.constant 0 : index
    %56 = vector.load %arg11[%c0_31, %c0_32] : memref<1x128xf32, #tpu.memory_space<vmem>>, vector<1x128xf32>
    %57 = vector.broadcast %56 : vector<1x128xf32> to vector<8x128xf32>
    %58 = arith.addf %55, %57 : vector<8x128xf32>
    %cst_33 = arith.constant 0.000000e+00 : f32
    %59 = vector.broadcast %cst_33 : f32 to vector<8x128xf32>
    %60 = arith.maximumf %58, %59 : vector<8x128xf32>
    %61 = arith.addf %52, %60 : vector<8x128xf32>
    %62 = arith.truncf %61 : vector<8x128xf32> to vector<8x128xbf16>
    %c0_34 = arith.constant 0 : index
    %c0_35 = arith.constant 0 : index
    %63 = vector.load %arg12[%c0_34, %c0_35] : memref<128x128xbf16, #tpu.memory_space<vmem>>, vector<128x128xbf16>
    %cst_36 = arith.constant dense<0.000000e+00> : vector<8x128xf32>
    %64 = tpu.matmul %62, %63, %cst_36 {dimension_numbers = #tpu.dot_dimension_numbers<[1], [0], [0], [1], [0, 0, 1, 1], [], []>} : vector<8x128xbf16>, vector<128x128xbf16>, vector<8x128xf32> -> vector<8x128xf32>
    %c0_37 = arith.constant 0 : index
    %c0_38 = arith.constant 0 : index
    %65 = vector.load %arg13[%c0_37, %c0_38] : memref<1x128xf32, #tpu.memory_space<vmem>>, vector<1x128xf32>
    %66 = vector.broadcast %65 : vector<1x128xf32> to vector<8x128xf32>
    %67 = arith.addf %64, %66 : vector<8x128xf32>
    %c0_39 = arith.constant 0 : index
    %c0_40 = arith.constant 0 : index
    %68 = vector.load %arg14[%c0_39, %c0_40] : memref<8x128xf32, #tpu.memory_space<vmem>>, vector<8x128xf32>
    tpu.vector_store %arg14[%c0_39, %c0_40], %67 {strides = array<i32>} : memref<8x128xf32, #tpu.memory_space<vmem>>, vector<8x128xf32>,
    return
  }
  func.func @transform_0(%arg0: i32) -> (i32, i32) {
    %c0_i32 = arith.constant 0 : i32
    %c0_i32_0 = arith.constant 0 : i32
    return %arg0, %c0_i32 : i32, i32
  }
  func.func @transform_1(%arg0: i32) -> (i32, i32) {
    %c0_i32 = arith.constant 0 : i32
    %c0_i32_0 = arith.constant 0 : i32
    %c0_i32_1 = arith.constant 0 : i32
    return %c0_i32, %c0_i32_0 : i32, i32
  }
  func.func @transform_2(%arg0: i32) -> (i32, i32) {
    %c0_i32 = arith.constant 0 : i32
    %c0_i32_0 = arith.constant 0 : i32
    %c0_i32_1 = arith.constant 0 : i32
    return %c0_i32, %c0_i32_0 : i32, i32
  }
  func.func @transform_3(%arg0: i32) -> (i32, i32) {
    %c0_i32 = arith.constant 0 : i32
    %c0_i32_0 = arith.constant 0 : i32
    %c0_i32_1 = arith.constant 0 : i32
    return %c0_i32, %c0_i32_0 : i32, i32
  }
  func.func @transform_4(%arg0: i32) -> (i32, i32) {
    %c0_i32 = arith.constant 0 : i32
    %c0_i32_0 = arith.constant 0 : i32
    %c0_i32_1 = arith.constant 0 : i32
    return %c0_i32, %c0_i32_0 : i32, i32
  }
  func.func @transform_5(%arg0: i32) -> (i32, i32) {
    %c0_i32 = arith.constant 0 : i32
    %c0_i32_0 = arith.constant 0 : i32
    %c0_i32_1 = arith.constant 0 : i32
    return %c0_i32, %c0_i32_0 : i32, i32
  }
  func.func @transform_6(%arg0: i32) -> (i32, i32) {
    %c0_i32 = arith.constant 0 : i32
    %c0_i32_0 = arith.constant 0 : i32
    %c0_i32_1 = arith.constant 0 : i32
    return %c0_i32, %c0_i32_0 : i32, i32
  }
  func.func @transform_7(%arg0: i32) -> (i32, i32) {
    %c0_i32 = arith.constant 0 : i32
    %c0_i32_0 = arith.constant 0 : i32
    %c0_i32_1 = arith.constant 0 : i32
    return %c0_i32, %c0_i32_0 : i32, i32
  }
  func.func @transform_8(%arg0: i32) -> (i32, i32) {
    %c0_i32 = arith.constant 0 : i32
    %c0_i32_0 = arith.constant 0 : i32
    %c0_i32_1 = arith.constant 0 : i32
    return %c0_i32, %c0_i32_0 : i32, i32
  }
  func.func @transform_9(%arg0: i32) -> (i32, i32) {
    %c0_i32 = arith.constant 0 : i32
    %c0_i32_0 = arith.constant 0 : i32
    %c0_i32_1 = arith.constant 0 : i32
    return %c0_i32, %c0_i32_0 : i32, i32
  }
  func.func @transform_10(%arg0: i32) -> (i32, i32) {
    %c0_i32 = arith.constant 0 : i32
    %c0_i32_0 = arith.constant 0 : i32
    %c0_i32_1 = arith.constant 0 : i32
    return %c0_i32, %c0_i32_0 : i32, i32
  }
  func.func @transform_11(%arg0: i32) -> (i32, i32) {
    %c0_i32 = arith.constant 0 : i32
    %c0_i32_0 = arith.constant 0 : i32
    %c0_i32_1 = arith.constant 0 : i32
    return %c0_i32, %c0_i32_0 : i32, i32
  }
  func.func @transform_12(%arg0: i32) -> (i32, i32) {
    %c0_i32 = arith.constant 0 : i32
    %c0_i32_0 = arith.constant 0 : i32
    %c0_i32_1 = arith.constant 0 : i32
    return %c0_i32, %c0_i32_0 : i32, i32
  }
  func.func @transform_13(%arg0: i32) -> (i32, i32) {
    %c0_i32 = arith.constant 0 : i32
    %c0_i32_0 = arith.constant 0 : i32
    return %arg0, %c0_i32 : i32, i32
  }
}

</mosaic_0001>

<llo_original>
// kernel: tpu_custom_call.1
$region0: #{tpu_custom_call.1}
  #allocation0 [shape = 'u32[]', space=smem, size = 0x4, offset = 0x4, fixed_abs, tag = 'smem constant byte address 0x4 - core index']
  #allocation1 [shape = 'u32[144,128]{1,0:T(1,128)}', space=vmem, size = 0x12000, scoped, tag = 'internal scratch']
  %s0 = inlined_call_operand.hbm [shape: f32[8,128], index: 0, kind: input, shape index: {}]
  %s1 = inlined_call_operand.hbm [shape: bf16[128,128], index: 1, kind: input, shape index: {}]
  %s2 = inlined_call_operand.vmem [shape: f32[1,128], index: 2, kind: input, shape index: {}]
  %s3 = inlined_call_operand.vmem [shape: f32[1,128], index: 3, kind: input, shape index: {}]
  %s4 = inlined_call_operand.vmem [shape: f32[1,128], index: 4, kind: input, shape index: {}]
  %s5 = inlined_call_operand.hbm [shape: bf16[128,128], index: 5, kind: input, shape index: {}]
  %s6 = inlined_call_operand.vmem [shape: f32[1,128], index: 6, kind: input, shape index: {}]
  %s7 = inlined_call_operand.hbm [shape: bf16[128,128], index: 7, kind: input, shape index: {}]
  %s8 = inlined_call_operand.vmem [shape: f32[1,128], index: 8, kind: input, shape index: {}]
  %s9 = inlined_call_operand.hbm [shape: bf16[128,128], index: 9, kind: input, shape index: {}]
  %s10 = inlined_call_operand.vmem [shape: f32[1,128], index: 10, kind: input, shape index: {}]
  %s11 = inlined_call_operand.hbm [shape: bf16[128,128], index: 11, kind: input, shape index: {}]
  %s12 = inlined_call_operand.vmem [shape: f32[1,128], index: 12, kind: input, shape index: {}]
  %s13 = inlined_call_operand.hbm [shape: f32[8,128], index: 13, kind: output, shape index: {}]
  %s14 = sld [smem:[#allocation0]]
  $region86: #{tpu_custom_call.1} parent=0
    _
  %s16 = ssub.s32 1, %s14
  %s17 = scalar_select 0, %s16, %s14
  $region1: #{tpu_custom_call.1} parent=0
    #allocation2 [shape = 'u8[4096]{0}', space=vmem, size = 0x1000, scoped, tag = 'input window, operand 0, single buffered']
    #allocation3 [shape = 's32[1]{0}', space=sflag, size = 0x4, scoped, tag = 'scoped memory for tpu_custom_call.1']
    #allocation4 [shape = 's32[1]{0}', space=sflag, size = 0x4, scoped, tag = 'scoped memory for tpu_custom_call.1']
    #allocation5 [shape = 'u8[32768]{0}', space=vmem, size = 0x8000, scoped, tag = 'input window, operand 1, single buffered']
    #allocation6 [shape = 's32[1]{0}', space=sflag, size = 0x4, scoped, tag = 'scoped memory for tpu_custom_call.1']
    #allocation7 [shape = 'u8[32768]{0}', space=vmem, size = 0x8000, scoped, tag = 'input window, operand 5, single buffered']
    #allocation8 [shape = 'u8[32768]{0}', space=vmem, size = 0x8000, scoped, tag = 'input window, operand 7, single buffered']
    #allocation9 [shape = 's32[1]{0}', space=sflag, size = 0x4, scoped, tag = 'scoped memory for tpu_custom_call.1']
    #allocation10 [shape = 'u8[32768]{0}', space=vmem, size = 0x8000, scoped, tag = 'input window, operand 9, single buffered']
    #allocation11 [shape = 'u8[32768]{0}', space=vmem, size = 0x8000, scoped, tag = 'input window, operand 11, single buffered']
    #allocation12 [shape = 's32[1]{0}', space=sflag, size = 0x4, scoped, tag = 'scoped memory for tpu_custom_call.1']
    #allocation13 [shape = 'u8[4096]{0}', space=vmem, size = 0x1000, scoped, tag = 'output window, operand 0, single buffered']
    %18 = vsyncpa [#allocation3], 0
    %19 = vsyncpa [#allocation6], 0
    %20 = vsyncpa [#allocation9], 0
    %21 = vsyncpa [#allocation12], 0
    %22 = vsyncpa [#allocation4], 0
    // Predicated region
    $region2: #{tpu_custom_call.1} parent=1 // pred_check
      _
    $region3: #{tpu_custom_call.1} parent=1 // pred_check_branch
      %24 = sbr.rel (0) target = $region5
    $region4: #{tpu_custom_call.1} parent=1 // pred_region
      %s26 = ssub.s32 128, 128
      %27 = vsyncadd [#allocation3], %s26
      %s29 = sshll.u32 [#allocation2], 4
      %s30 = int_to_ptr.vmem [resolvable:$true] %s29
      %32 = dma.hbm_to_vmem [thread:$0]  %s0, 128, %s30, [#allocation3]
    $region5: #{tpu_custom_call.1} parent=1 // pred_fallthru
      _
    // Predicated region
    $region6: #{tpu_custom_call.1} parent=1 // pred_check
      _
    $region7: #{tpu_custom_call.1} parent=1 // pred_check_branch
      %34 = sbr.rel (0) target = $region9
    $region8: #{tpu_custom_call.1} parent=1 // pred_region
      %s36 = ssub.s32 1024, 1024
      %37 = vsyncadd [#allocation6], %s36
      %s38 = sshll.u32 [#allocation5], 4
      %s39 = int_to_ptr.vmem [resolvable:$true] %s38
      %44 = dma.hbm_to_vmem [thread:$0]  %s1, 1024, %s39, [#allocation6], 64, 64, 4
    $region9: #{tpu_custom_call.1} parent=1 // pred_fallthru
      _
    // Predicated region
    $region10: #{tpu_custom_call.1} parent=1 // pred_check
      _
    $region11: #{tpu_custom_call.1} parent=1 // pred_check_branch
      %46 = sbr.rel (0) target = $region13
    $region12: #{tpu_custom_call.1} parent=1 // pred_region
      _
    $region13: #{tpu_custom_call.1} parent=1 // pred_fallthru
      _
    // Predicated region
    $region14: #{tpu_custom_call.1} parent=1 // pred_check
      _
    $region15: #{tpu_custom_call.1} parent=1 // pred_check_branch
      %48 = sbr.rel (0) target = $region17
    $region16: #{tpu_custom_call.1} parent=1 // pred_region
      _
    $region17: #{tpu_custom_call.1} parent=1 // pred_fallthru
      _
    // Predicated region
    $region18: #{tpu_custom_call.1} parent=1 // pred_check
      _
    $region19: #{tpu_custom_call.1} parent=1 // pred_check_branch
      %50 = sbr.rel (0) target = $region21
    $region20: #{tpu_custom_call.1} parent=1 // pred_region
      _
    $region21: #{tpu_custom_call.1} parent=1 // pred_fallthru
      _
    // Predicated region
    $region22: #{tpu_custom_call.1} parent=1 // pred_check
      _
    $region23: #{tpu_custom_call.1} parent=1 // pred_check_branch
      %52 = sbr.rel (0) target = $region25
    $region24: #{tpu_custom_call.1} parent=1 // pred_region
      %s54 = ssub.s32 1024, 1024
      %55 = vsyncadd [#allocation6], %s54
      %s56 = sshll.u32 [#allocation7], 4
      %s57 = int_to_ptr.vmem [resolvable:$true] %s56
      %62 = dma.hbm_to_vmem [thread:$0]  %s5, 1024, %s57, [#allocation6], 64, 64, 4
    $region25: #{tpu_custom_call.1} parent=1 // pred_fallthru
      _
    // Predicated region
    $region26: #{tpu_custom_call.1} parent=1 // pred_check
      _
    $region27: #{tpu_custom_call.1} parent=1 // pred_check_branch
      %64 = sbr.rel (0) target = $region29
    $region28: #{tpu_custom_call.1} parent=1 // pred_region
      _
    $region29: #{tpu_custom_call.1} parent=1 // pred_fallthru
      _
    // Predicated region
    $region30: #{tpu_custom_call.1} parent=1 // pred_check
      _
    $region31: #{tpu_custom_call.1} parent=1 // pred_check_branch
      %66 = sbr.rel (0) target = $region33
    $region32: #{tpu_custom_call.1} parent=1 // pred_region
      %s68 = ssub.s32 1024, 1024
      %69 = vsyncadd [#allocation9], %s68
      %s70 = sshll.u32 [#allocation8], 4
      %s71 = int_to_ptr.vmem [resolvable:$true] %s70
      %76 = dma.hbm_to_vmem [thread:$0]  %s7, 1024, %s71, [#allocation9], 64, 64, 4
    $region33: #{tpu_custom_call.1} parent=1 // pred_fallthru
      _
    // Predicated region
    $region34: #{tpu_custom_call.1} parent=1 // pred_check
      _
    $region35: #{tpu_custom_call.1} parent=1 // pred_check_branch
      %78 = sbr.rel (0) target = $region37
    $region36: #{tpu_custom_call.1} parent=1 // pred_region
      _
    $region37: #{tpu_custom_call.1} parent=1 // pred_fallthru
      _
    // Predicated region
    $region38: #{tpu_custom_call.1} parent=1 // pred_check
      _
    $region39: #{tpu_custom_call.1} parent=1 // pred_check_branch
      %80 = sbr.rel (0) target = $region41
    $region40: #{tpu_custom_call.1} parent=1 // pred_region
      %s82 = ssub.s32 1024, 1024
      %83 = vsyncadd [#allocation9], %s82
      %s84 = sshll.u32 [#allocation10], 4
      %s85 = int_to_ptr.vmem [resolvable:$true] %s84
      %90 = dma.hbm_to_vmem [thread:$0]  %s9, 1024, %s85, [#allocation9], 64, 64, 4
    $region41: #{tpu_custom_call.1} parent=1 // pred_fallthru
      _
    // Predicated region
    $region42: #{tpu_custom_call.1} parent=1 // pred_check
      _
    $region43: #{tpu_custom_call.1} parent=1 // pred_check_branch
      %92 = sbr.rel (0) target = $region45
    $region44: #{tpu_custom_call.1} parent=1 // pred_region
      _
    $region45: #{tpu_custom_call.1} parent=1 // pred_fallthru
      _
    // Predicated region
    $region46: #{tpu_custom_call.1} parent=1 // pred_check
      _
    $region47: #{tpu_custom_call.1} parent=1 // pred_check_branch
      %94 = sbr.rel (0) target = $region49
    $region48: #{tpu_custom_call.1} parent=1 // pred_region
      %s96 = ssub.s32 1024, 1024
      %97 = vsyncadd [#allocation12], %s96
      %s98 = sshll.u32 [#allocation11], 4
      %s99 = int_to_ptr.vmem [resolvable:$true] %s98
      %104 = dma.hbm_to_vmem [thread:$0]  %s11, 1024, %s99, [#allocation12], 64, 64, 4
    $region49: #{tpu_custom_call.1} parent=1 // pred_fallthru
      _
    // Predicated region
    $region50: #{tpu_custom_call.1} parent=1 // pred_check
      _
    $region51: #{tpu_custom_call.1} parent=1 // pred_check_branch
      %106 = sbr.rel (0) target = $region53
    $region52: #{tpu_custom_call.1} parent=1 // pred_region
      _
    $region53: #{tpu_custom_call.1} parent=1 // pred_fallthru
      _
    // Predicated region
    $region54: #{tpu_custom_call.1} parent=1 // pred_check
      _
    $region55: #{tpu_custom_call.1} parent=1 // pred_check_branch
      %108 = sbr.rel (0) target = $region57
    $region56: #{tpu_custom_call.1} parent=1 // pred_region
      %109 = dma.done [#allocation3], 128
    $region57: #{tpu_custom_call.1} parent=1 // pred_fallthru
      _
    // Predicated region
    $region58: #{tpu_custom_call.1} parent=1 // pred_check
      _
    $region59: #{tpu_custom_call.1} parent=1 // pred_check_branch
      %111 = sbr.rel (0) target = $region61
    $region60: #{tpu_custom_call.1} parent=1 // pred_region
      %112 = dma.done [#allocation6], 1024
    $region61: #{tpu_custom_call.1} parent=1 // pred_fallthru
      _
    // Predicated region
    $region62: #{tpu_custom_call.1} parent=1 // pred_check
      _
    $region63: #{tpu_custom_call.1} parent=1 // pred_check_branch
      %114 = sbr.rel (0) target = $region65
    $region64: #{tpu_custom_call.1} parent=1 // pred_region
      %115 = dma.done [#allocation6], 1024
    $region65: #{tpu_custom_call.1} parent=1 // pred_fallthru
      _
    // Predicated region
    $region66: #{tpu_custom_call.1} parent=1 // pred_check
      _
    $region67: #{tpu_custom_call.1} parent=1 // pred_check_branch
      %117 = sbr.rel (0) target = $region69
    $region68: #{tpu_custom_call.1} parent=1 // pred_region
      %118 = dma.done [#allocation9], 1024
    $region69: #{tpu_custom_call.1} parent=1 // pred_fallthru
      _
    // Predicated region
    $region70: #{tpu_custom_call.1} parent=1 // pred_check
      _
    $region71: #{tpu_custom_call.1} parent=1 // pred_check_branch
      %120 = sbr.rel (0) target = $region73
    $region72: #{tpu_custom_call.1} parent=1 // pred_region
      %121 = dma.done [#allocation9], 1024
    $region73: #{tpu_custom_call.1} parent=1 // pred_fallthru
      _
    // Predicated region
    $region74: #{tpu_custom_call.1} parent=1 // pred_check
      _
    $region75: #{tpu_custom_call.1} parent=1 // pred_check_branch
      %123 = sbr.rel (0) target = $region77
    $region76: #{tpu_custom_call.1} parent=1 // pred_region
      %124 = dma.done [#allocation12], 1024
    $region77: #{tpu_custom_call.1} parent=1 // pred_fallthru
      _
    %v126 = vld [vmem:[#allocation2] sm:$0xff]
    %v127 = vpack.c.bf16 %v126, %v126
    %v128 = vld [vmem:[#allocation5] sm:$0xf]
    %v129 = vld [vmem:[#allocation5 + $0x4] sm:$0xf]
    %v130 = vld [vmem:[#allocation5 + $0x8] sm:$0xf]
    %v131 = vld [vmem:[#allocation5 + $0xc] sm:$0xf]
    %v132 = vld [vmem:[#allocation5 + $0x10] sm:$0xf]
    %v133 = vld [vmem:[#allocation5 + $0x14] sm:$0xf]
    %v134 = vld [vmem:[#allocation5 + $0x18] sm:$0xf]
    %v135 = vld [vmem:[#allocation5 + $0x1c] sm:$0xf]
    %v136 = vld [vmem:[#allocation5 + $0x20] sm:$0xf]
    %v137 = vld [vmem:[#allocation5 + $0x24] sm:$0xf]
    %v138 = vld [vmem:[#allocation5 + $0x28] sm:$0xf]
    %v139 = vld [vmem:[#allocation5 + $0x2c] sm:$0xf]
    %v140 = vld [vmem:[#allocation5 + $0x30] sm:$0xf]
    %v141 = vld [vmem:[#allocation5 + $0x34] sm:$0xf]
    %v142 = vld [vmem:[#allocation5 + $0x38] sm:$0xf]
    %v143 = vld [vmem:[#allocation5 + $0x3c] sm:$0xf]
    %v144 = vld [vmem:[%s2] sm:$0x1]
    %v146 = vlaneseq
    %v147 = vshrl.u32 %v146, 7
    %v148 = vsub.s32 0, %v147
    %v149 = vrot.slane %v144, %v148
    %v167 = vunpack.c.l.b16 %v128
    %v168 = vunpack.c.l.b16 %v129
    %v169 = vunpack.c.l.b16 %v130
    %v170 = vunpack.c.l.b16 %v131
    %v171 = vunpack.c.l.b16 %v132
    %v172 = vunpack.c.l.b16 %v133
    %v173 = vunpack.c.l.b16 %v134
    %v174 = vunpack.c.l.b16 %v135
    %v175 = vunpack.c.l.b16 %v136
    %v176 = vunpack.c.l.b16 %v137
    %v177 = vunpack.c.l.b16 %v138
    %v178 = vunpack.c.l.b16 %v139
    %v179 = vunpack.c.l.b16 %v140
    %v180 = vunpack.c.l.b16 %v141
    %v181 = vunpack.c.l.b16 %v142
    %v182 = vunpack.c.l.b16 %v143
    %v183 = vpack.c.b16 %v168, %v167
    %v184 = vpack.c.b16 %v170, %v169
    %v185 = vpack.c.b16 %v172, %v171
    %v186 = vpack.c.b16 %v174, %v173
    %v187 = vpack.c.b16 %v176, %v175
    %v188 = vpack.c.b16 %v178, %v177
    %v189 = vpack.c.b16 %v180, %v179
    %v190 = vpack.c.b16 %v182, %v181
    %199 = vmatprep.subr.bf16.mxu0 0
    %200 = vmatpush1.bf16.msra.mxu0 %v183
    %201 = vmatprep.subr.bf16.mxu0 0
    %202 = vmatpush1.bf16.msra.mxu0 %v184
    %203 = vmatprep.subr.bf16.mxu0 0
    %204 = vmatpush1.bf16.msra.mxu0 %v185
    %205 = vmatprep.subr.bf16.mxu0 0
    %206 = vmatpush1.bf16.msra.mxu0 %v186
    %207 = vmatprep.subr.bf16.mxu0 0
    %208 = vmatpush1.bf16.msra.mxu0 %v187
    %209 = vmatprep.subr.bf16.mxu0 0
    %210 = vmatpush1.bf16.msra.mxu0 %v188
    %211 = vmatprep.subr.bf16.mxu0 0
    %212 = vmatpush1.bf16.msra.mxu0 %v189
    %213 = vmatprep.subr.bf16.mxu0 0
    %214 = vmatpush1.bf16.msra.mxu0 %v190
    %215 = vmatprep.subr.bf16.mxu0 0
    %216 = vmatpush1.bf16.msra.mxu0 0
    %217 = vmatprep.subr.bf16.mxu0 0
    %218 = vmatpush1.bf16.msra.mxu0 0
    %219 = vmatprep.subr.bf16.mxu0 0
    %220 = vmatpush1.bf16.msra.mxu0 0
    %221 = vmatprep.subr.bf16.mxu0 0
    %222 = vmatpush1.bf16.msra.mxu0 0
    %223 = vmatprep.subr.bf16.mxu0 0
    %224 = vmatpush1.bf16.msra.mxu0 0
    %225 = vmatprep.subr.bf16.mxu0 0
    %226 = vmatpush1.bf16.msra.mxu0 0
    %227 = vmatprep.subr.bf16.mxu0 0
    %228 = vmatpush1.bf16.msra.mxu0 0
    %229 = vmatprep.subr.bf16.mxu0 0
    %230 = vmatpush1.bf16.msra.mxu0 0
    %231 = vmatprep.mubr.bf16.mxu0 0
    %232 = vmatmul.mubr.bf16.gmra.mrb[0].mxu0 %v127
    %v233 = vpop.f32.mrb[0].mxu0
    %v234 = vadd.f32 %v149, %v233
    %v235 = vpop.f32.mrb[0].mxu0
    %v236 = vpop.f32.mrb[0].mxu0
    %v237 = vpop.f32.mrb[0].mxu0
    %238 = vdwg.mxu0
    %v239 = vmax.f32 %v234, 0.0
    %240 = vadd.xlane.f32.xlu0 %v239
    %v241 = vpop.xlane.xlu0 %240
    %v242 = vmul.f32 %v239, %v239
    %243 = vadd.xlane.f32.xlu0 %v242
    %v244 = vpop.xlane.xlu0 %243
    %v245 = vmul.f32 %v241, 0.03125
    %v246 = vmul.f32 %v244, 0.03125
    %v247 = vmul.f32 %v245, %v245
    %v248 = vsub.f32 %v246, %v247
    %v249 = vmax.f32 %v248, 0.0
    %v250 = vsub.f32 %v239, %v245
    %v251 = vadd.f32 %v249, 1e-05
    %v252 = vrsqrt.pop %v251
    %v253 = vmul.f32 %v250, %v252
    %v254 = vld [vmem:[%s3] sm:$0x1]
    %v256 = vlaneseq
    %v257 = vshrl.u32 %v256, 7
    %v258 = vsub.s32 0, %v257
    %v259 = vrot.slane %v254, %v258
    %v261 = vmul.f32 %v253, %v259
    %v262 = vld [vmem:[%s4] sm:$0x1]
    %v264 = vlaneseq
    %v265 = vshrl.u32 %v264, 7
    %v266 = vsub.s32 0, %v265
    %v267 = vrot.slane %v262, %v266
    %v269 = vadd.f32 %v261, %v267
    %v270 = vpack.c.bf16 %v269, %v269
    %v271 = vld [vmem:[#allocation7] sm:$0xf]
    %v272 = vld [vmem:[#allocation7 + $0x4] sm:$0xf]
    %v273 = vld [vmem:[#allocation7 + $0x8] sm:$0xf]
    %v274 = vld [vmem:[#allocation7 + $0xc] sm:$0xf]
    %v275 = vld [vmem:[#allocation7 + $0x10] sm:$0xf]
    %v276 = vld [vmem:[#allocation7 + $0x14] sm:$0xf]
    %v277 = vld [vmem:[#allocation7 + $0x18] sm:$0xf]
    %v278 = vld [vmem:[#allocation7 + $0x1c] sm:$0xf]
    %v279 = vld [vmem:[#allocation7 + $0x20] sm:$0xf]
    %v280 = vld [vmem:[#allocation7 + $0x24] sm:$0xf]
    %v281 = vld [vmem:[#allocation7 + $0x28] sm:$0xf]
    %v282 = vld [vmem:[#allocation7 + $0x2c] sm:$0xf]
    %v283 = vld [vmem:[#allocation7 + $0x30] sm:$0xf]
    %v284 = vld [vmem:[#allocation7 + $0x34] sm:$0xf]
    %v285 = vld [vmem:[#allocation7 + $0x38] sm:$0xf]
    %v286 = vld [vmem:[#allocation7 + $0x3c] sm:$0xf]
    %v287 = vld [vmem:[%s6] sm:$0x1]
    %v289 = vlaneseq
    %v290 = vshrl.u32 %v289, 7
    %v291 = vsub.s32 0, %v290
    %v292 = vrot.slane %v287, %v291
    %v310 = vunpack.c.l.b16 %v271
    %v311 = vunpack.c.l.b16 %v272
    %v312 = vunpack.c.l.b16 %v273
    %v313 = vunpack.c.l.b16 %v274
    %v314 = vunpack.c.l.b16 %v275
    %v315 = vunpack.c.l.b16 %v276
    %v316 = vunpack.c.l.b16 %v277
    %v317 = vunpack.c.l.b16 %v278
    %v318 = vunpack.c.l.b16 %v279
    %v319 = vunpack.c.l.b16 %v280
    %v320 = vunpack.c.l.b16 %v281
    %v321 = vunpack.c.l.b16 %v282
    %v322 = vunpack.c.l.b16 %v283
    %v323 = vunpack.c.l.b16 %v284
    %v324 = vunpack.c.l.b16 %v285
    %v325 = vunpack.c.l.b16 %v286
    %v326 = vpack.c.b16 %v311, %v310
    %v327 = vpack.c.b16 %v313, %v312
    %v328 = vpack.c.b16 %v315, %v314
    %v329 = vpack.c.b16 %v317, %v316
    %v330 = vpack.c.b16 %v319, %v318
    %v331 = vpack.c.b16 %v321, %v320
    %v332 = vpack.c.b16 %v323, %v322
    %v333 = vpack.c.b16 %v325, %v324
    %342 = vmatprep.subr.bf16.mxu0 0
    %343 = vmatpush1.bf16.msra.mxu0 %v326
    %344 = vmatprep.subr.bf16.mxu0 0
    %345 = vmatpush1.bf16.msra.mxu0 %v327
    %346 = vmatprep.subr.bf16.mxu0 0
    %347 = vmatpush1.bf16.msra.mxu0 %v328
    %348 = vmatprep.subr.bf16.mxu0 0
    %349 = vmatpush1.bf16.msra.mxu0 %v329
    %350 = vmatprep.subr.bf16.mxu0 0
    %351 = vmatpush1.bf16.msra.mxu0 %v330
    %352 = vmatprep.subr.bf16.mxu0 0
    %353 = vmatpush1.bf16.msra.mxu0 %v331
    %354 = vmatprep.subr.bf16.mxu0 0
    %355 = vmatpush1.bf16.msra.mxu0 %v332
    %356 = vmatprep.subr.bf16.mxu0 0
    %357 = vmatpush1.bf16.msra.mxu0 %v333
    %358 = vmatprep.subr.bf16.mxu0 0
    %359 = vmatpush1.bf16.msra.mxu0 0
    %360 = vmatprep.subr.bf16.mxu0 0
    %361 = vmatpush1.bf16.msra.mxu0 0
    %362 = vmatprep.subr.bf16.mxu0 0
    %363 = vmatpush1.bf16.msra.mxu0 0
    %364 = vmatprep.subr.bf16.mxu0 0
    %365 = vmatpush1.bf16.msra.mxu0 0
    %366 = vmatprep.subr.bf16.mxu0 0
    %367 = vmatpush1.bf16.msra.mxu0 0
    %368 = vmatprep.subr.bf16.mxu0 0
    %369 = vmatpush1.bf16.msra.mxu0 0
    %370 = vmatprep.subr.bf16.mxu0 0
    %371 = vmatpush1.bf16.msra.mxu0 0
    %372 = vmatprep.subr.bf16.mxu0 0
    %373 = vmatpush1.bf16.msra.mxu0 0
    %374 = vmatprep.mubr.bf16.mxu0 0
    %375 = vmatmul.mubr.bf16.gmra.mrb[0].mxu0 %v270
    %v376 = vpop.f32.mrb[0].mxu0
    %v377 = vadd.f32 %v292, %v376
    %v378 = vpop.f32.mrb[0].mxu0
    %v379 = vpop.f32.mrb[0].mxu0
    %v380 = vpop.f32.mrb[0].mxu0
    %381 = vdwg.mxu0
    %v382 = vmax.f32 %v377, 0.0
    %v383 = vadd.f32 %v269, %v382
    %v384 = vpack.c.bf16 %v383, %v383
    %v385 = vld [vmem:[#allocation8] sm:$0xf]
    %v386 = vld [vmem:[#allocation8 + $0x4] sm:$0xf]
    %v387 = vld [vmem:[#allocation8 + $0x8] sm:$0xf]
    %v388 = vld [vmem:[#allocation8 + $0xc] sm:$0xf]
    %v389 = vld [vmem:[#allocation8 + $0x10] sm:$0xf]
    %v390 = vld [vmem:[#allocation8 + $0x14] sm:$0xf]
    %v391 = vld [vmem:[#allocation8 + $0x18] sm:$0xf]
    %v392 = vld [vmem:[#allocation8 + $0x1c] sm:$0xf]
    %v393 = vld [vmem:[#allocation8 + $0x20] sm:$0xf]
    %v394 = vld [vmem:[#allocation8 + $0x24] sm:$0xf]
    %v395 = vld [vmem:[#allocation8 + $0x28] sm:$0xf]
    %v396 = vld [vmem:[#allocation8 + $0x2c] sm:$0xf]
    %v397 = vld [vmem:[#allocation8 + $0x30] sm:$0xf]
    %v398 = vld [vmem:[#allocation8 + $0x34] sm:$0xf]
    %v399 = vld [vmem:[#allocation8 + $0x38] sm:$0xf]
    %v400 = vld [vmem:[#allocation8 + $0x3c] sm:$0xf]
    %v401 = vld [vmem:[%s8] sm:$0x1]
    %v403 = vlaneseq
    %v404 = vshrl.u32 %v403, 7
    %v405 = vsub.s32 0, %v404
    %v406 = vrot.slane %v401, %v405
    %v424 = vunpack.c.l.b16 %v385
    %v425 = vunpack.c.l.b16 %v386
    %v426 = vunpack.c.l.b16 %v387
    %v427 = vunpack.c.l.b16 %v388
    %v428 = vunpack.c.l.b16 %v389
    %v429 = vunpack.c.l.b16 %v390
    %v430 = vunpack.c.l.b16 %v391
    %v431 = vunpack.c.l.b16 %v392
    %v432 = vunpack.c.l.b16 %v393
    %v433 = vunpack.c.l.b16 %v394
    %v434 = vunpack.c.l.b16 %v395
    %v435 = vunpack.c.l.b16 %v396
    %v436 = vunpack.c.l.b16 %v397
    %v437 = vunpack.c.l.b16 %v398
    %v438 = vunpack.c.l.b16 %v399
    %v439 = vunpack.c.l.b16 %v400
    %v440 = vpack.c.b16 %v425, %v424
    %v441 = vpack.c.b16 %v427, %v426
    %v442 = vpack.c.b16 %v429, %v428
    %v443 = vpack.c.b16 %v431, %v430
    %v444 = vpack.c.b16 %v433, %v432
    %v445 = vpack.c.b16 %v435, %v434
    %v446 = vpack.c.b16 %v437, %v436
    %v447 = vpack.c.b16 %v439, %v438
    %456 = vmatprep.subr.bf16.mxu0 0
    %457 = vmatpush1.bf16.msra.mxu0 %v440
    %458 = vmatprep.subr.bf16.mxu0 0
    %459 = vmatpush1.bf16.msra.mxu0 %v441
    %460 = vmatprep.subr.bf16.mxu0 0
    %461 = vmatpush1.bf16.msra.mxu0 %v442
    %462 = vmatprep.subr.bf16.mxu0 0
    %463 = vmatpush1.bf16.msra.mxu0 %v443
    %464 = vmatprep.subr.bf16.mxu0 0
    %465 = vmatpush1.bf16.msra.mxu0 %v444
    %466 = vmatprep.subr.bf16.mxu0 0
    %467 = vmatpush1.bf16.msra.mxu0 %v445
    %468 = vmatprep.subr.bf16.mxu0 0
    %469 = vmatpush1.bf16.msra.mxu0 %v446
    %470 = vmatprep.subr.bf16.mxu0 0
    %471 = vmatpush1.bf16.msra.mxu0 %v447
    %472 = vmatprep.subr.bf16.mxu0 0
    %473 = vmatpush1.bf16.msra.mxu0 0
    %474 = vmatprep.subr.bf16.mxu0 0
    %475 = vmatpush1.bf16.msra.mxu0 0
    %476 = vmatprep.subr.bf16.mxu0 0
    %477 = vmatpush1.bf16.msra.mxu0 0
    %478 = vmatprep.subr.bf16.mxu0 0
    %479 = vmatpush1.bf16.msra.mxu0 0
    %480 = vmatprep.subr.bf16.mxu0 0
    %481 = vmatpush1.bf16.msra.mxu0 0
    %482 = vmatprep.subr.bf16.mxu0 0
    %483 = vmatpush1.bf16.msra.mxu0 0
    %484 = vmatprep.subr.bf16.mxu0 0
    %485 = vmatpush1.bf16.msra.mxu0 0
    %486 = vmatprep.subr.bf16.mxu0 0
    %487 = vmatpush1.bf16.msra.mxu0 0
    %488 = vmatprep.mubr.bf16.mxu0 0
    %489 = vmatmul.mubr.bf16.gmra.mrb[0].mxu0 %v384
    %v490 = vpop.f32.mrb[0].mxu0
    %v491 = vadd.f32 %v406, %v490
    %v492 = vpop.f32.mrb[0].mxu0
    %v493 = vpop.f32.mrb[0].mxu0
    %v494 = vpop.f32.mrb[0].mxu0
    %495 = vdwg.mxu0
    %v496 = vmax.f32 %v491, 0.0
    %v497 = vadd.f32 %v383, %v496
    %v498 = vpack.c.bf16 %v497, %v497
    %v499 = vld [vmem:[#allocation10] sm:$0xf]
    %v500 = vld [vmem:[#allocation10 + $0x4] sm:$0xf]
    %v501 = vld [vmem:[#allocation10 + $0x8] sm:$0xf]
    %v502 = vld [vmem:[#allocation10 + $0xc] sm:$0xf]
    %v503 = vld [vmem:[#allocation10 + $0x10] sm:$0xf]
    %v504 = vld [vmem:[#allocation10 + $0x14] sm:$0xf]
    %v505 = vld [vmem:[#allocation10 + $0x18] sm:$0xf]
    %v506 = vld [vmem:[#allocation10 + $0x1c] sm:$0xf]
    %v507 = vld [vmem:[#allocation10 + $0x20] sm:$0xf]
    %v508 = vld [vmem:[#allocation10 + $0x24] sm:$0xf]
    %v509 = vld [vmem:[#allocation10 + $0x28] sm:$0xf]
    %v510 = vld [vmem:[#allocation10 + $0x2c] sm:$0xf]
    %v511 = vld [vmem:[#allocation10 + $0x30] sm:$0xf]
    %v512 = vld [vmem:[#allocation10 + $0x34] sm:$0xf]
    %v513 = vld [vmem:[#allocation10 + $0x38] sm:$0xf]
    %v514 = vld [vmem:[#allocation10 + $0x3c] sm:$0xf]
    %v515 = vld [vmem:[%s10] sm:$0x1]
    %v517 = vlaneseq
    %v518 = vshrl.u32 %v517, 7
    %v519 = vsub.s32 0, %v518
    %v520 = vrot.slane %v515, %v519
    %v538 = vunpack.c.l.b16 %v499
    %v539 = vunpack.c.l.b16 %v500
    %v540 = vunpack.c.l.b16 %v501
    %v541 = vunpack.c.l.b16 %v502
    %v542 = vunpack.c.l.b16 %v503
    %v543 = vunpack.c.l.b16 %v504
    %v544 = vunpack.c.l.b16 %v505
    %v545 = vunpack.c.l.b16 %v506
    %v546 = vunpack.c.l.b16 %v507
    %v547 = vunpack.c.l.b16 %v508
    %v548 = vunpack.c.l.b16 %v509
    %v549 = vunpack.c.l.b16 %v510
    %v550 = vunpack.c.l.b16 %v511
    %v551 = vunpack.c.l.b16 %v512
    %v552 = vunpack.c.l.b16 %v513
    %v553 = vunpack.c.l.b16 %v514
    %v554 = vpack.c.b16 %v539, %v538
    %v555 = vpack.c.b16 %v541, %v540
    %v556 = vpack.c.b16 %v543, %v542
    %v557 = vpack.c.b16 %v545, %v544
    %v558 = vpack.c.b16 %v547, %v546
    %v559 = vpack.c.b16 %v549, %v548
    %v560 = vpack.c.b16 %v551, %v550
    %v561 = vpack.c.b16 %v553, %v552
    %570 = vmatprep.subr.bf16.mxu0 0
    %571 = vmatpush1.bf16.msra.mxu0 %v554
    %572 = vmatprep.subr.bf16.mxu0 0
    %573 = vmatpush1.bf16.msra.mxu0 %v555
    %574 = vmatprep.subr.bf16.mxu0 0
    %575 = vmatpush1.bf16.msra.mxu0 %v556
    %576 = vmatprep.subr.bf16.mxu0 0
    %577 = vmatpush1.bf16.msra.mxu0 %v557
    %578 = vmatprep.subr.bf16.mxu0 0
    %579 = vmatpush1.bf16.msra.mxu0 %v558
    %580 = vmatprep.subr.bf16.mxu0 0
    %581 = vmatpush1.bf16.msra.mxu0 %v559
    %582 = vmatprep.subr.bf16.mxu0 0
    %583 = vmatpush1.bf16.msra.mxu0 %v560
    %584 = vmatprep.subr.bf16.mxu0 0
    %585 = vmatpush1.bf16.msra.mxu0 %v561
    %586 = vmatprep.subr.bf16.mxu0 0
    %587 = vmatpush1.bf16.msra.mxu0 0
    %588 = vmatprep.subr.bf16.mxu0 0
    %589 = vmatpush1.bf16.msra.mxu0 0
    %590 = vmatprep.subr.bf16.mxu0 0
    %591 = vmatpush1.bf16.msra.mxu0 0
    %592 = vmatprep.subr.bf16.mxu0 0
    %593 = vmatpush1.bf16.msra.mxu0 0
    %594 = vmatprep.subr.bf16.mxu0 0
    %595 = vmatpush1.bf16.msra.mxu0 0
    %596 = vmatprep.subr.bf16.mxu0 0
    %597 = vmatpush1.bf16.msra.mxu0 0
    %598 = vmatprep.subr.bf16.mxu0 0
    %599 = vmatpush1.bf16.msra.mxu0 0
    %600 = vmatprep.subr.bf16.mxu0 0
    %601 = vmatpush1.bf16.msra.mxu0 0
    %602 = vmatprep.mubr.bf16.mxu0 0
    %603 = vmatmul.mubr.bf16.gmra.mrb[0].mxu0 %v498
    %v604 = vpop.f32.mrb[0].mxu0
    %v605 = vadd.f32 %v520, %v604
    %v606 = vpop.f32.mrb[0].mxu0
    %v607 = vpop.f32.mrb[0].mxu0
    %v608 = vpop.f32.mrb[0].mxu0
    %609 = vdwg.mxu0
    %v610 = vmax.f32 %v605, 0.0
    %v611 = vadd.f32 %v497, %v610
    %v612 = vpack.c.bf16 %v611, %v611
    %v613 = vld [vmem:[#allocation11] sm:$0xf]
    %v614 = vld [vmem:[#allocation11 + $0x4] sm:$0xf]
    %v615 = vld [vmem:[#allocation11 + $0x8] sm:$0xf]
    %v616 = vld [vmem:[#allocation11 + $0xc] sm:$0xf]
    %v617 = vld [vmem:[#allocation11 + $0x10] sm:$0xf]
    %v618 = vld [vmem:[#allocation11 + $0x14] sm:$0xf]
    %v619 = vld [vmem:[#allocation11 + $0x18] sm:$0xf]
    %v620 = vld [vmem:[#allocation11 + $0x1c] sm:$0xf]
    %v621 = vld [vmem:[#allocation11 + $0x20] sm:$0xf]
    %v622 = vld [vmem:[#allocation11 + $0x24] sm:$0xf]
    %v623 = vld [vmem:[#allocation11 + $0x28] sm:$0xf]
    %v624 = vld [vmem:[#allocation11 + $0x2c] sm:$0xf]
    %v625 = vld [vmem:[#allocation11 + $0x30] sm:$0xf]
    %v626 = vld [vmem:[#allocation11 + $0x34] sm:$0xf]
    %v627 = vld [vmem:[#allocation11 + $0x38] sm:$0xf]
    %v628 = vld [vmem:[#allocation11 + $0x3c] sm:$0xf]
    %v629 = vld [vmem:[%s12] sm:$0x1]
    %v631 = vlaneseq
    %v632 = vshrl.u32 %v631, 7
    %v633 = vsub.s32 0, %v632
    %v634 = vrot.slane %v629, %v633
    %v652 = vunpack.c.l.b16 %v613
    %v653 = vunpack.c.l.b16 %v614
    %v654 = vunpack.c.l.b16 %v615
    %v655 = vunpack.c.l.b16 %v616
    %v656 = vunpack.c.l.b16 %v617
    %v657 = vunpack.c.l.b16 %v618
    %v658 = vunpack.c.l.b16 %v619
    %v659 = vunpack.c.l.b16 %v620
    %v660 = vunpack.c.l.b16 %v621
    %v661 = vunpack.c.l.b16 %v622
    %v662 = vunpack.c.l.b16 %v623
    %v663 = vunpack.c.l.b16 %v624
    %v664 = vunpack.c.l.b16 %v625
    %v665 = vunpack.c.l.b16 %v626
    %v666 = vunpack.c.l.b16 %v627
    %v667 = vunpack.c.l.b16 %v628
    %v668 = vpack.c.b16 %v653, %v652
    %v669 = vpack.c.b16 %v655, %v654
    %v670 = vpack.c.b16 %v657, %v656
    %v671 = vpack.c.b16 %v659, %v658
    %v672 = vpack.c.b16 %v661, %v660
    %v673 = vpack.c.b16 %v663, %v662
    %v674 = vpack.c.b16 %v665, %v664
    %v675 = vpack.c.b16 %v667, %v666
    %684 = vmatprep.subr.bf16.mxu0 0
    %685 = vmatpush1.bf16.msra.mxu0 %v668
    %686 = vmatprep.subr.bf16.mxu0 0
    %687 = vmatpush1.bf16.msra.mxu0 %v669
    %688 = vmatprep.subr.bf16.mxu0 0
    %689 = vmatpush1.bf16.msra.mxu0 %v670
    %690 = vmatprep.subr.bf16.mxu0 0
    %691 = vmatpush1.bf16.msra.mxu0 %v671
    %692 = vmatprep.subr.bf16.mxu0 0
    %693 = vmatpush1.bf16.msra.mxu0 %v672
    %694 = vmatprep.subr.bf16.mxu0 0
    %695 = vmatpush1.bf16.msra.mxu0 %v673
    %696 = vmatprep.subr.bf16.mxu0 0
    %697 = vmatpush1.bf16.msra.mxu0 %v674
    %698 = vmatprep.subr.bf16.mxu0 0
    %699 = vmatpush1.bf16.msra.mxu0 %v675
    %700 = vmatprep.subr.bf16.mxu0 0
    %701 = vmatpush1.bf16.msra.mxu0 0
    %702 = vmatprep.subr.bf16.mxu0 0
    %703 = vmatpush1.bf16.msra.mxu0 0
    %704 = vmatprep.subr.bf16.mxu0 0
    %705 = vmatpush1.bf16.msra.mxu0 0
    %706 = vmatprep.subr.bf16.mxu0 0
    %707 = vmatpush1.bf16.msra.mxu0 0
    %708 = vmatprep.subr.bf16.mxu0 0
    %709 = vmatpush1.bf16.msra.mxu0 0
    %710 = vmatprep.subr.bf16.mxu0 0
    %711 = vmatpush1.bf16.msra.mxu0 0
    %712 = vmatprep.subr.bf16.mxu0 0
    %713 = vmatpush1.bf16.msra.mxu0 0
    %714 = vmatprep.subr.bf16.mxu0 0
    %715 = vmatpush1.bf16.msra.mxu0 0
    %716 = vmatprep.mubr.bf16.mxu0 0
    %717 = vmatmul.mubr.bf16.gmra.mrb[0].mxu0 %v612
    %v718 = vpop.f32.mrb[0].mxu0
    %v719 = vadd.f32 %v634, %v718
    %v720 = vpop.f32.mrb[0].mxu0
    %v721 = vpop.f32.mrb[0].mxu0
    %v722 = vpop.f32.mrb[0].mxu0
    %723 = vdwg.mxu0
    %724 = vst [vmem:[#allocation13] sm:$0xff] %v719
    // Predicated region
    $region78: #{tpu_custom_call.1} parent=1 // pred_check
      _
    $region79: #{tpu_custom_call.1} parent=1 // pred_check_branch
      %726 = sbr.rel (0) target = $region81
    $region80: #{tpu_custom_call.1} parent=1 // pred_region
      %s728 = ssub.s32 128, 128
      %729 = vsyncadd [#allocation4], %s728
      %s731 = sshll.u32 [#allocation13], 4
      %s732 = int_to_ptr.vmem [resolvable:$true] %s731
      %734 = dma.vmem_to_hbm [thread:$0]  %s732, 128, %s13, [#allocation4]
    $region81: #{tpu_custom_call.1} parent=1 // pred_fallthru
      _
    // Predicated region
    $region82: #{tpu_custom_call.1} parent=1 // pred_check
      _
    $region83: #{tpu_custom_call.1} parent=1 // pred_check_branch
      %736 = sbr.rel (0) target = $region85
    $region84: #{tpu_custom_call.1} parent=1 // pred_region
      %737 = dma.done [#allocation4], 128
    $region85: #{tpu_custom_call.1} parent=1 // pred_fallthru
      _
    %738 = vsyncpa [#allocation3], 1
    %739 = vsyncpa [#allocation6], 1
    %740 = vsyncpa [#allocation9], 1
    %741 = vsyncpa [#allocation12], 1
    %742 = vsyncpa [#allocation4], 1

</llo_original>
